<compile_context>
chip_gen: v7x
topology: tpu7x:2x2x1
jax: 0.10.0
libtpu: 0.0.40
codegen_flags: <defaults>
</compile_context>

<pallas_src>
import numpy as np
import jax
import jax.numpy as jnp
from jax.experimental import pallas as pl
from jax.experimental.pallas import tpu as pltpu


def _relu6(x):
    return jnp.clip(x, 0.0, 6.0)


def _round_up(x, m):
    return ((x + m - 1) // m) * m


def classifier_tail_kernel(x_ref,
                           w1_ref, b1_ref,
                           w2_ref, b2_ref,
                           w3_ref, b3_ref,
                           w4_ref, b4_ref,
                           o_ref):
    # Weights are bf16 in VMEM; accumulate in f32 on the MXU; bias/ReLU6 in f32.
    h = jnp.dot(x_ref[...].astype(jnp.bfloat16), w1_ref[...],
                preferred_element_type=jnp.float32)
    h = _relu6(h + b1_ref[...])                       # Linear1 + ReLU6 (+Dropout=id)

    h = jnp.dot(h.astype(jnp.bfloat16), w2_ref[...],
                preferred_element_type=jnp.float32)
    h = _relu6(h + b2_ref[...])                       # Linear2 + ReLU6 (+Dropout=id)

    h = jnp.dot(h.astype(jnp.bfloat16), w3_ref[...],
                preferred_element_type=jnp.float32)
    h = _relu6(h + b3_ref[...])                       # Linear3 + ReLU6

    o = jnp.dot(h.astype(jnp.bfloat16), w4_ref[...],
                preferred_element_type=jnp.float32)
    o_ref[...] = (o + b4_ref[...]).astype(o_ref.dtype)  # Linear4 (logits, lane-padded)


def prepare_params(params):
    """One-time prep: cast weights to bf16, lane-pad the final layer to 128.

    Do this once at load/init time and reuse the result across calls — it
    avoids per-call HBM traffic for casting/padding the weights.
    """
    n_classes = params["w4"].shape[1]
    n_pad = max(128, pl.cdiv(n_classes, 128) * 128)
    prepped = {
        "w1": params["w1"].astype(jnp.bfloat16),
        "w2": params["w2"].astype(jnp.bfloat16),
        "w3": params["w3"].astype(jnp.bfloat16),
        "w4": jnp.pad(params["w4"],
                      ((0, 0), (0, n_pad - n_classes))).astype(jnp.bfloat16),
        "b1": params["b1"].astype(jnp.float32),
        "b2": params["b2"].astype(jnp.float32),
        "b3": params["b3"].astype(jnp.float32),
        "b4": jnp.pad(params["b4"],
                      ((0, 0), (0, n_pad - n_classes))).astype(jnp.float32),
    }
    return prepped, n_classes


def classifier_tail(x, prepped, n_classes, *, block_b=1024, min_tiles=2,
                    logits_dtype=jnp.float32):
    """x: (B, d_in) float32.  prepped: output of prepare_params()."""
    B, d_in = x.shape
    w1, w2, w3, w4 = prepped["w1"], prepped["w2"], prepped["w3"], prepped["w4"]
    b1, b2, b3, b4 = prepped["b1"], prepped["b2"], prepped["b3"], prepped["b4"]
    h1 = w1.shape[1]
    h2 = w2.shape[1]
    h3 = w3.shape[1]
    n_pad = w4.shape[1]

    # Balanced batch tiling: just enough tiles (each a multiple of 8 sublanes),
    # and an even tile count >= min_tiles so v7x's two TensorCores both get work.
    n_tiles = max(pl.cdiv(B, block_b), 1)
    if min_tiles > 1 and B >= 16:
        n_tiles = _round_up(max(n_tiles, min_tiles), min_tiles)
    TB = _round_up(pl.cdiv(B, n_tiles), 8)
    grid_b = pl.cdiv(B, TB)
    B_pad = TB * grid_b
    x_p = x if B_pad == B else jnp.pad(x, ((0, B_pad - B), (0, 0)))

    flops = 2 * B_pad * (d_in * h1 + h1 * h2 + h2 * h3 + h3 * n_pad)
    bytes_accessed = (x_p.size * x_p.dtype.itemsize
                      + (w1.size + w2.size + w3.size + w4.size) * 2
                      + (b1.size + b2.size + b3.size + b4.size) * 4
                      + B_pad * n_pad * jnp.dtype(logits_dtype).itemsize)

    const = lambda i: (0, 0)
    single = pl.Buffered(1)   # constant blocks never re-DMA -> no double buffer

    out = pl.pallas_call(
        classifier_tail_kernel,
        out_shape=jax.ShapeDtypeStruct((B_pad, n_pad), logits_dtype),
        grid=(grid_b,),
        in_specs=[
            pl.BlockSpec((TB, d_in), lambda i: (i, 0)),   # x tile, pipelined
            pl.BlockSpec((d_in, h1), const, pipeline_mode=single),   # resident weights
            pl.BlockSpec((1, h1),    const, pipeline_mode=single),
            pl.BlockSpec((h1, h2),   const, pipeline_mode=single),
            pl.BlockSpec((1, h2),    const, pipeline_mode=single),
            pl.BlockSpec((h2, h3),   const, pipeline_mode=single),
            pl.BlockSpec((1, h3),    const, pipeline_mode=single),
            pl.BlockSpec((h3, n_pad), const, pipeline_mode=single),
            pl.BlockSpec((1, n_pad),  const, pipeline_mode=single),
        ],
        out_specs=pl.BlockSpec((TB, n_pad), lambda i: (i, 0)),
        compiler_params=pltpu.CompilerParams(
            dimension_semantics=("parallel",)),
        cost_estimate=pl.CostEstimate(flops=flops, transcendentals=0,
                                      bytes_accessed=bytes_accessed),
    )(x_p, w1, b1, w2, b2, w3, b3, w4, b4)

    return out[:B, :n_classes]


def init_params(key, n_classes, n_branches, branch_embedding_size):
    """Deterministic init mirroring nn.Linear default (U(-1/sqrt(fan_in), +...))."""
    d_in = branch_embedding_size * n_branches
    mult = np.sqrt(n_branches)
    h1 = int(np.round(256 * mult))
    h2 = int(np.round(128 * mult))
    dims = [(d_in, h1), (h1, h2), (h2, h2), (h2, n_classes)]

    params = {}
    for i, (fi, fo) in enumerate(dims, start=1):
        key, kw, kb = jax.random.split(key, 3)
        bound = 1.0 / np.sqrt(fi)
        params[f"w{i}"] = jax.random.uniform(kw, (fi, fo), jnp.float32, -bound, bound)
        params[f"b{i}"] = jax.random.uniform(kb, (1, fo), jnp.float32, -bound, bound)
    return params


def classifier_tail_ref(x, p):
    """Plain-JAX reference matching the kernel's bf16-input / f32-accumulate math."""
    def lin(h, w, b):
        return jnp.dot(h.astype(jnp.bfloat16), w.astype(jnp.bfloat16),
                       preferred_element_type=jnp.float32) + b
    h = _relu6(lin(x, p["w1"], p["b1"]))
    h = _relu6(lin(h, p["w2"], p["b2"]))
    h = _relu6(lin(h, p["w3"], p["b3"]))
    return lin(h, p["w4"], p["b4"])


if __name__ == "__main__":
    # Small, module-consistent shapes: d_in = 32, h1 = 512, h2 = 256.
    n_classes = 10
    n_branches = 4
    branch_embedding_size = 8
    d_in = branch_embedding_size * n_branches

    key = jax.random.PRNGKey(0)
    key, kx1, kx2 = jax.random.split(key, 3)
    params = init_params(key, n_classes, n_branches, branch_embedding_size)
    prepped, nc = prepare_params(params)   # one-time weight prep, reused below

    # Tiny batch (single tile).
    x_small = jax.random.normal(kx1, (2, d_in), jnp.float32)
    out_small = jax.block_until_ready(classifier_tail(x_small, prepped, nc))
    assert out_small.shape == (2, n_classes)
    np.testing.assert_allclose(np.asarray(out_small),
                               np.asarray(classifier_tail_ref(x_small, params)),
                               rtol=1e-2, atol=1e-2)

    # Non-multiple-of-8 batch, exercises the balanced two-tile grid path.
    x_big = jax.random.normal(kx2, (20, d_in), jnp.float32)
    out_big = jax.block_until_ready(classifier_tail(x_big, prepped, nc))
    assert out_big.shape == (20, n_classes)
    np.testing.assert_allclose(np.asarray(out_big),
                               np.asarray(classifier_tail_ref(x_big, params)),
                               rtol=1e-2, atol=1e-2)

    print("KERNEL_OK")
</pallas_src>

<mosaic_0001>
module attributes {stable_mosaic.version = 11 : i64} {
  func.func @classifier_tail_kernel(%arg0: i32, %arg1: memref<8x32xf32, #tpu.memory_space<vmem>>, %arg2: memref<32x512xbf16, #tpu.memory_space<vmem>>, %arg3: memref<1x512xf32, #tpu.memory_space<vmem>>, %arg4: memref<512x256xbf16, #tpu.memory_space<vmem>>, %arg5: memref<1x256xf32, #tpu.memory_space<vmem>>, %arg6: memref<256x256xbf16, #tpu.memory_space<vmem>>, %arg7: memref<1x256xf32, #tpu.memory_space<vmem>>, %arg8: memref<256x128xbf16, #tpu.memory_space<vmem>>, %arg9: memref<1x128xf32, #tpu.memory_space<vmem>>, %arg10: memref<8x128xf32, #tpu.memory_space<vmem>>) attributes {dimension_semantics = [#tpu.dimension_semantics<parallel>], iteration_bounds = array<i64: 1>, scalar_prefetch = 0 : i64, scratch_operands = 0 : i64, tpu.core_type = #tpu.core_type<tc>, window_params = [{transform_indices = @transform_0, window_bounds = array<i64: 8, 32>}, {pipeline_mode = #tpu.pipeline_mode<synchronous>, transform_indices = @transform_1, window_bounds = array<i64: 32, 512>}, {pipeline_mode = #tpu.pipeline_mode<synchronous>, transform_indices = @transform_2, window_bounds = array<i64: 1, 512>}, {pipeline_mode = #tpu.pipeline_mode<synchronous>, transform_indices = @transform_3, window_bounds = array<i64: 512, 256>}, {pipeline_mode = #tpu.pipeline_mode<synchronous>, transform_indices = @transform_4, window_bounds = array<i64: 1, 256>}, {pipeline_mode = #tpu.pipeline_mode<synchronous>, transform_indices = @transform_5, window_bounds = array<i64: 256, 256>}, {pipeline_mode = #tpu.pipeline_mode<synchronous>, transform_indices = @transform_6, window_bounds = array<i64: 1, 256>}, {pipeline_mode = #tpu.pipeline_mode<synchronous>, transform_indices = @transform_7, window_bounds = array<i64: 256, 128>}, {pipeline_mode = #tpu.pipeline_mode<synchronous>, transform_indices = @transform_8, window_bounds = array<i64: 1, 128>}, {transform_indices = @transform_9, window_bounds = array<i64: 8, 128>}]} {
    %c0 = arith.constant 0 : index
    %c0_0 = arith.constant 0 : index
    %0 = vector.load %arg1[%c0, %c0_0] : memref<8x32xf32, #tpu.memory_space<vmem>>, vector<8x32xf32>
    %1 = arith.truncf %0 : vector<8x32xf32> to vector<8x32xbf16>
    %c0_1 = arith.constant 0 : index
    %c0_2 = arith.constant 0 : index
    %2 = vector.load %arg2[%c0_1, %c0_2] : memref<32x512xbf16, #tpu.memory_space<vmem>>, vector<32x512xbf16>
    %cst = arith.constant dense<0.000000e+00> : vector<8x512xf32>
    %3 = tpu.matmul %1, %2, %cst {dimension_numbers = #tpu.dot_dimension_numbers<[1], [0], [0], [1], [0, 0, 1, 1], [], []>} : vector<8x32xbf16>, vector<32x512xbf16>, vector<8x512xf32> -> vector<8x512xf32>
    %c0_3 = arith.constant 0 : index
    %c0_4 = arith.constant 0 : index
    %4 = vector.load %arg3[%c0_3, %c0_4] : memref<1x512xf32, #tpu.memory_space<vmem>>, vector<1x512xf32>
    %5 = vector.broadcast %4 : vector<1x512xf32> to vector<8x512xf32>
    %6 = arith.addf %3, %5 : vector<8x512xf32>
    %cst_5 = arith.constant 0.000000e+00 : f32
    %cst_6 = arith.constant 6.000000e+00 : f32
    %7 = vector.broadcast %cst_5 : f32 to vector<8x512xf32>
    %8 = arith.maximumf %7, %6 : vector<8x512xf32>
    %9 = vector.broadcast %cst_6 : f32 to vector<8x512xf32>
    %10 = arith.minimumf %9, %8 : vector<8x512xf32>
    %11 = arith.truncf %10 : vector<8x512xf32> to vector<8x512xbf16>
    %c0_7 = arith.constant 0 : index
    %c0_8 = arith.constant 0 : index
    %12 = vector.load %arg4[%c0_7, %c0_8] : memref<512x256xbf16, #tpu.memory_space<vmem>>, vector<512x256xbf16>
    %cst_9 = arith.constant dense<0.000000e+00> : vector<8x256xf32>
    %13 = tpu.matmul %11, %12, %cst_9 {dimension_numbers = #tpu.dot_dimension_numbers<[1], [0], [0], [1], [0, 0, 1, 1], [], []>} : vector<8x512xbf16>, vector<512x256xbf16>, vector<8x256xf32> -> vector<8x256xf32>
    %c0_10 = arith.constant 0 : index
    %c0_11 = arith.constant 0 : index
    %14 = vector.load %arg5[%c0_10, %c0_11] : memref<1x256xf32, #tpu.memory_space<vmem>>, vector<1x256xf32>
    %15 = vector.broadcast %14 : vector<1x256xf32> to vector<8x256xf32>
    %16 = arith.addf %13, %15 : vector<8x256xf32>
    %cst_12 = arith.constant 0.000000e+00 : f32
    %cst_13 = arith.constant 6.000000e+00 : f32
    %17 = vector.broadcast %cst_12 : f32 to vector<8x256xf32>
    %18 = arith.maximumf %17, %16 : vector<8x256xf32>
    %19 = vector.broadcast %cst_13 : f32 to vector<8x256xf32>
    %20 = arith.minimumf %19, %18 : vector<8x256xf32>
    %21 = arith.truncf %20 : vector<8x256xf32> to vector<8x256xbf16>
    %c0_14 = arith.constant 0 : index
    %c0_15 = arith.constant 0 : index
    %22 = vector.load %arg6[%c0_14, %c0_15] : memref<256x256xbf16, #tpu.memory_space<vmem>>, vector<256x256xbf16>
    %cst_16 = arith.constant dense<0.000000e+00> : vector<8x256xf32>
    %23 = tpu.matmul %21, %22, %cst_16 {dimension_numbers = #tpu.dot_dimension_numbers<[1], [0], [0], [1], [0, 0, 1, 1], [], []>} : vector<8x256xbf16>, vector<256x256xbf16>, vector<8x256xf32> -> vector<8x256xf32>
    %c0_17 = arith.constant 0 : index
    %c0_18 = arith.constant 0 : index
    %24 = vector.load %arg7[%c0_17, %c0_18] : memref<1x256xf32, #tpu.memory_space<vmem>>, vector<1x256xf32>
    %25 = vector.broadcast %24 : vector<1x256xf32> to vector<8x256xf32>
    %26 = arith.addf %23, %25 : vector<8x256xf32>
    %cst_19 = arith.constant 0.000000e+00 : f32
    %cst_20 = arith.constant 6.000000e+00 : f32
    %27 = vector.broadcast %cst_19 : f32 to vector<8x256xf32>
    %28 = arith.maximumf %27, %26 : vector<8x256xf32>
    %29 = vector.broadcast %cst_20 : f32 to vector<8x256xf32>
    %30 = arith.minimumf %29, %28 : vector<8x256xf32>
    %31 = arith.truncf %30 : vector<8x256xf32> to vector<8x256xbf16>
    %c0_21 = arith.constant 0 : index
    %c0_22 = arith.constant 0 : index
    %32 = vector.load %arg8[%c0_21, %c0_22] : memref<256x128xbf16, #tpu.memory_space<vmem>>, vector<256x128xbf16>
    %cst_23 = arith.constant dense<0.000000e+00> : vector<8x128xf32>
    %33 = tpu.matmul %31, %32, %cst_23 {dimension_numbers = #tpu.dot_dimension_numbers<[1], [0], [0], [1], [0, 0, 1, 1], [], []>} : vector<8x256xbf16>, vector<256x128xbf16>, vector<8x128xf32> -> vector<8x128xf32>
    %c0_24 = arith.constant 0 : index
    %c0_25 = arith.constant 0 : index
    %34 = vector.load %arg9[%c0_24, %c0_25] : memref<1x128xf32, #tpu.memory_space<vmem>>, vector<1x128xf32>
    %35 = vector.broadcast %34 : vector<1x128xf32> to vector<8x128xf32>
    %36 = arith.addf %33, %35 : vector<8x128xf32>
    %c0_26 = arith.constant 0 : index
    %c0_27 = arith.constant 0 : index
    %37 = vector.load %arg10[%c0_26, %c0_27] : memref<8x128xf32, #tpu.memory_space<vmem>>, vector<8x128xf32>
    tpu.vector_store %arg10[%c0_26, %c0_27], %36 {strides = array<i32>} : memref<8x128xf32, #tpu.memory_space<vmem>>, vector<8x128xf32>,
    return
  }
  func.func @transform_0(%arg0: i32) -> (i32, i32) {
    %c0_i32 = arith.constant 0 : i32
    %c0_i32_0 = arith.constant 0 : i32
    return %arg0, %c0_i32 : i32, i32
  }
  func.func @transform_1(%arg0: i32) -> (i32, i32) {
    %c0_i32 = arith.constant 0 : i32
    %c0_i32_0 = arith.constant 0 : i32
    %c0_i32_1 = arith.constant 0 : i32
    return %c0_i32, %c0_i32_0 : i32, i32
  }
  func.func @transform_2(%arg0: i32) -> (i32, i32) {
    %c0_i32 = arith.constant 0 : i32
    %c0_i32_0 = arith.constant 0 : i32
    %c0_i32_1 = arith.constant 0 : i32
    return %c0_i32, %c0_i32_0 : i32, i32
  }
  func.func @transform_3(%arg0: i32) -> (i32, i32) {
    %c0_i32 = arith.constant 0 : i32
    %c0_i32_0 = arith.constant 0 : i32
    %c0_i32_1 = arith.constant 0 : i32
    return %c0_i32, %c0_i32_0 : i32, i32
  }
  func.func @transform_4(%arg0: i32) -> (i32, i32) {
    %c0_i32 = arith.constant 0 : i32
    %c0_i32_0 = arith.constant 0 : i32
    %c0_i32_1 = arith.constant 0 : i32
    return %c0_i32, %c0_i32_0 : i32, i32
  }
  func.func @transform_5(%arg0: i32) -> (i32, i32) {
    %c0_i32 = arith.constant 0 : i32
    %c0_i32_0 = arith.constant 0 : i32
    %c0_i32_1 = arith.constant 0 : i32
    return %c0_i32, %c0_i32_0 : i32, i32
  }
  func.func @transform_6(%arg0: i32) -> (i32, i32) {
    %c0_i32 = arith.constant 0 : i32
    %c0_i32_0 = arith.constant 0 : i32
    %c0_i32_1 = arith.constant 0 : i32
    return %c0_i32, %c0_i32_0 : i32, i32
  }
  func.func @transform_7(%arg0: i32) -> (i32, i32) {
    %c0_i32 = arith.constant 0 : i32
    %c0_i32_0 = arith.constant 0 : i32
    %c0_i32_1 = arith.constant 0 : i32
    return %c0_i32, %c0_i32_0 : i32, i32
  }
  func.func @transform_8(%arg0: i32) -> (i32, i32) {
    %c0_i32 = arith.constant 0 : i32
    %c0_i32_0 = arith.constant 0 : i32
    %c0_i32_1 = arith.constant 0 : i32
    return %c0_i32, %c0_i32_0 : i32, i32
  }
  func.func @transform_9(%arg0: i32) -> (i32, i32) {
    %c0_i32 = arith.constant 0 : i32
    %c0_i32_0 = arith.constant 0 : i32
    return %arg0, %c0_i32 : i32, i32
  }
}

</mosaic_0001>

<llo_original>
// kernel: tpu_custom_call.1
$region0: #{tpu_custom_call.1}
  #allocation0 [shape = 'u32[]', space=smem, size = 0x4, offset = 0x4, fixed_abs, tag = 'smem constant byte address 0x4 - core index']
  #allocation1 [shape = 'u32[144,128]{1,0:T(1,128)}', space=vmem, size = 0x12000, scoped, tag = 'internal scratch']
  %s0 = inlined_call_operand.hbm [shape: f32[8,32], index: 0, kind: input, shape index: {}]
  %s1 = inlined_call_operand.hbm [shape: bf16[32,512], index: 1, kind: input, shape index: {}]
  %s2 = inlined_call_operand.vmem [shape: f32[1,512], index: 2, kind: input, shape index: {}]
  %s3 = inlined_call_operand.hbm [shape: bf16[512,256], index: 3, kind: input, shape index: {}]
  %s4 = inlined_call_operand.vmem [shape: f32[1,256], index: 4, kind: input, shape index: {}]
  %s5 = inlined_call_operand.hbm [shape: bf16[256,256], index: 5, kind: input, shape index: {}]
  %s6 = inlined_call_operand.vmem [shape: f32[1,256], index: 6, kind: input, shape index: {}]
  %s7 = inlined_call_operand.hbm [shape: bf16[256,128], index: 7, kind: input, shape index: {}]
  %s8 = inlined_call_operand.vmem [shape: f32[1,128], index: 8, kind: input, shape index: {}]
  %s9 = inlined_call_operand.hbm [shape: f32[8,128], index: 9, kind: output, shape index: {}]
  %s10 = sld [smem:[#allocation0]]
  $region66: #{tpu_custom_call.1} parent=0
    _
  %s12 = ssub.s32 1, %s10
  %s13 = scalar_select 0, %s12, %s10
  $region1: #{tpu_custom_call.1} parent=0
    #allocation2 [shape = 'u8[4096]{0}', space=vmem, size = 0x1000, scoped, tag = 'input window, operand 0, single buffered']
    #allocation3 [shape = 's32[1]{0}', space=sflag, size = 0x4, scoped, tag = 'scoped memory for tpu_custom_call.1']
    #allocation4 [shape = 's32[1]{0}', space=sflag, size = 0x4, scoped, tag = 'scoped memory for tpu_custom_call.1']
    #allocation5 [shape = 'u8[32768]{0}', space=vmem, size = 0x8000, scoped, tag = 'input window, operand 1, single buffered']
    #allocation6 [shape = 's32[1]{0}', space=sflag, size = 0x4, scoped, tag = 'scoped memory for tpu_custom_call.1']
    #allocation7 [shape = 'u8[262144]{0}', space=vmem, size = 0x40000, scoped, tag = 'input window, operand 3, single buffered']
    #allocation8 [shape = 'u8[131072]{0}', space=vmem, size = 0x20000, scoped, tag = 'input window, operand 5, single buffered']
    #allocation9 [shape = 's32[1]{0}', space=sflag, size = 0x4, scoped, tag = 'scoped memory for tpu_custom_call.1']
    #allocation10 [shape = 'u8[65536]{0}', space=vmem, size = 0x10000, scoped, tag = 'input window, operand 7, single buffered']
    #allocation11 [shape = 'u8[4096]{0}', space=vmem, size = 0x1000, scoped, tag = 'output window, operand 0, single buffered']
    %14 = vsyncpa [#allocation3], 0
    %15 = vsyncpa [#allocation6], 0
    %16 = vsyncpa [#allocation9], 0
    %17 = vsyncpa [#allocation4], 0
    // Predicated region
    $region2: #{tpu_custom_call.1} parent=1 // pred_check
      _
    $region3: #{tpu_custom_call.1} parent=1 // pred_check_branch
      %19 = sbr.rel (0) target = $region5
    $region4: #{tpu_custom_call.1} parent=1 // pred_region
      %s21 = ssub.s32 128, 128
      %22 = vsyncadd [#allocation3], %s21
      %s24 = sshll.u32 [#allocation2], 4
      %s25 = int_to_ptr.vmem [resolvable:$true] %s24
      %27 = dma.hbm_to_vmem [thread:$0]  %s0, 128, %s25, [#allocation3]
    $region5: #{tpu_custom_call.1} parent=1 // pred_fallthru
      _
    // Predicated region
    $region6: #{tpu_custom_call.1} parent=1 // pred_check
      _
    $region7: #{tpu_custom_call.1} parent=1 // pred_check_branch
      %29 = sbr.rel (0) target = $region9
    $region8: #{tpu_custom_call.1} parent=1 // pred_region
      %s31 = ssub.s32 1024, 1024
      %32 = vsyncadd [#allocation6], %s31
      %s33 = sshll.u32 [#allocation5], 4
      %s34 = int_to_ptr.vmem [resolvable:$true] %s33
      %39 = dma.hbm_to_vmem [thread:$0]  %s1, 1024, %s34, [#allocation6], 256, 256, 16
    $region9: #{tpu_custom_call.1} parent=1 // pred_fallthru
      _
    // Predicated region
    $region10: #{tpu_custom_call.1} parent=1 // pred_check
      _
    $region11: #{tpu_custom_call.1} parent=1 // pred_check_branch
      %41 = sbr.rel (0) target = $region13
    $region12: #{tpu_custom_call.1} parent=1 // pred_region
      _
    $region13: #{tpu_custom_call.1} parent=1 // pred_fallthru
      _
    // Predicated region
    $region14: #{tpu_custom_call.1} parent=1 // pred_check
      _
    $region15: #{tpu_custom_call.1} parent=1 // pred_check_branch
      %43 = sbr.rel (0) target = $region17
    $region16: #{tpu_custom_call.1} parent=1 // pred_region
      %s45 = ssub.s32 8192, 8192
      %46 = vsyncadd [#allocation6], %s45
      %s47 = sshll.u32 [#allocation7], 4
      %s48 = int_to_ptr.vmem [resolvable:$true] %s47
      %53 = dma.hbm_to_vmem [thread:$0]  %s3, 8192, %s48, [#allocation6], 128, 128, 8
    $region17: #{tpu_custom_call.1} parent=1 // pred_fallthru
      _
    // Predicated region
    $region18: #{tpu_custom_call.1} parent=1 // pred_check
      _
    $region19: #{tpu_custom_call.1} parent=1 // pred_check_branch
      %55 = sbr.rel (0) target = $region21
    $region20: #{tpu_custom_call.1} parent=1 // pred_region
      _
    $region21: #{tpu_custom_call.1} parent=1 // pred_fallthru
      _
    // Predicated region
    $region22: #{tpu_custom_call.1} parent=1 // pred_check
      _
    $region23: #{tpu_custom_call.1} parent=1 // pred_check_branch
      %57 = sbr.rel (0) target = $region25
    $region24: #{tpu_custom_call.1} parent=1 // pred_region
      %s59 = ssub.s32 4096, 4096
      %60 = vsyncadd [#allocation9], %s59
      %s61 = sshll.u32 [#allocation8], 4
      %s62 = int_to_ptr.vmem [resolvable:$true] %s61
      %67 = dma.hbm_to_vmem [thread:$0]  %s5, 4096, %s62, [#allocation9], 128, 128, 8
    $region25: #{tpu_custom_call.1} parent=1 // pred_fallthru
      _
    // Predicated region
    $region26: #{tpu_custom_call.1} parent=1 // pred_check
      _
    $region27: #{tpu_custom_call.1} parent=1 // pred_check_branch
      %69 = sbr.rel (0) target = $region29
    $region28: #{tpu_custom_call.1} parent=1 // pred_region
      _
    $region29: #{tpu_custom_call.1} parent=1 // pred_fallthru
      _
    // Predicated region
    $region30: #{tpu_custom_call.1} parent=1 // pred_check
      _
    $region31: #{tpu_custom_call.1} parent=1 // pred_check_branch
      %71 = sbr.rel (0) target = $region33
    $region32: #{tpu_custom_call.1} parent=1 // pred_region
      %s73 = ssub.s32 2048, 2048
      %74 = vsyncadd [#allocation9], %s73
      %s75 = sshll.u32 [#allocation10], 4
      %s76 = int_to_ptr.vmem [resolvable:$true] %s75
      %81 = dma.hbm_to_vmem [thread:$0]  %s7, 2048, %s76, [#allocation9], 64, 64, 4
    $region33: #{tpu_custom_call.1} parent=1 // pred_fallthru
      _
    // Predicated region
    $region34: #{tpu_custom_call.1} parent=1 // pred_check
      _
    $region35: #{tpu_custom_call.1} parent=1 // pred_check_branch
      %83 = sbr.rel (0) target = $region37
    $region36: #{tpu_custom_call.1} parent=1 // pred_region
      _
    $region37: #{tpu_custom_call.1} parent=1 // pred_fallthru
      _
    // Predicated region
    $region38: #{tpu_custom_call.1} parent=1 // pred_check
      _
    $region39: #{tpu_custom_call.1} parent=1 // pred_check_branch
      %85 = sbr.rel (0) target = $region41
    $region40: #{tpu_custom_call.1} parent=1 // pred_region
      %86 = dma.done [#allocation3], 128
    $region41: #{tpu_custom_call.1} parent=1 // pred_fallthru
      _
    // Predicated region
    $region42: #{tpu_custom_call.1} parent=1 // pred_check
      _
    $region43: #{tpu_custom_call.1} parent=1 // pred_check_branch
      %88 = sbr.rel (0) target = $region45
    $region44: #{tpu_custom_call.1} parent=1 // pred_region
      %89 = dma.done [#allocation6], 1024
    $region45: #{tpu_custom_call.1} parent=1 // pred_fallthru
      _
    // Predicated region
    $region46: #{tpu_custom_call.1} parent=1 // pred_check
      _
    $region47: #{tpu_custom_call.1} parent=1 // pred_check_branch
      %91 = sbr.rel (0) target = $region49
    $region48: #{tpu_custom_call.1} parent=1 // pred_region
      %92 = dma.done [#allocation6], 8192
    $region49: #{tpu_custom_call.1} parent=1 // pred_fallthru
      _
    // Predicated region
    $region50: #{tpu_custom_call.1} parent=1 // pred_check
      _
    $region51: #{tpu_custom_call.1} parent=1 // pred_check_branch
      %94 = sbr.rel (0) target = $region53
    $region52: #{tpu_custom_call.1} parent=1 // pred_region
      %95 = dma.done [#allocation9], 4096
    $region53: #{tpu_custom_call.1} parent=1 // pred_fallthru
      _
    // Predicated region
    $region54: #{tpu_custom_call.1} parent=1 // pred_check
      _
    $region55: #{tpu_custom_call.1} parent=1 // pred_check_branch
      %97 = sbr.rel (0) target = $region57
    $region56: #{tpu_custom_call.1} parent=1 // pred_region
      %98 = dma.done [#allocation9], 2048
    $region57: #{tpu_custom_call.1} parent=1 // pred_fallthru
      _
    %v100 = vld [vmem:[#allocation2] sm:$0xff]
    %v101 = vpack.c.bf16 %v100, %v100
    %v102 = vld [vmem:[#allocation5] sm:$0xff]
    %v103 = vld [vmem:[#allocation5 + $0x8] sm:$0xff]
    %v104 = vld [vmem:[#allocation5 + $0x10] sm:$0xff]
    %v105 = vld [vmem:[#allocation5 + $0x18] sm:$0xff]
    %v106 = vld [vmem:[#allocation5 + $0x20] sm:$0xff]
    %v107 = vld [vmem:[#allocation5 + $0x28] sm:$0xff]
    %v108 = vld [vmem:[#allocation5 + $0x30] sm:$0xff]
    %v109 = vld [vmem:[#allocation5 + $0x38] sm:$0xff]
    %v110 = vld [vmem:[%s2] sm:$0xf]
    %v112 = vlaneseq
    %v113 = vshrl.u32 %v112, 7
    %v114 = vsub.s32 0, %v113
    %v115 = vrot.slane %v110, %v114
    %v116 = vlaneseq
    %v117 = vshrl.u32 %v116, 7
    %v118 = vsub.s32 1, %v117
    %v119 = vrot.slane %v110, %v118
    %v120 = vlaneseq
    %v121 = vshrl.u32 %v120, 7
    %v122 = vsub.s32 2, %v121
    %v123 = vrot.slane %v110, %v122
    %v124 = vlaneseq
    %v125 = vshrl.u32 %v124, 7
    %v126 = vsub.s32 3, %v125
    %v127 = vrot.slane %v110, %v126
    %v140 = vunpack.c.l.b16 %v102
    %v141 = vunpack.c.h.b16 %v102
    %v142 = vunpack.c.l.b16 %v103
    %v143 = vunpack.c.h.b16 %v103
    %v144 = vunpack.c.l.b16 %v104
    %v145 = vunpack.c.h.b16 %v104
    %v146 = vunpack.c.l.b16 %v105
    %v147 = vunpack.c.h.b16 %v105
    %v148 = vunpack.c.l.b16 %v106
    %v149 = vunpack.c.h.b16 %v106
    %v150 = vunpack.c.l.b16 %v107
    %v151 = vunpack.c.h.b16 %v107
    %v152 = vunpack.c.l.b16 %v108
    %v153 = vunpack.c.h.b16 %v108
    %v154 = vunpack.c.l.b16 %v109
    %v155 = vunpack.c.h.b16 %v109
    %v156 = vpack.c.b16 %v144, %v140
    %v157 = vpack.c.b16 %v145, %v141
    %v158 = vpack.c.b16 %v146, %v142
    %v159 = vpack.c.b16 %v147, %v143
    %v160 = vpack.c.b16 %v152, %v148
    %v161 = vpack.c.b16 %v153, %v149
    %v162 = vpack.c.b16 %v154, %v150
    %v163 = vpack.c.b16 %v155, %v151
    %vm172 = vcmask 261120
    %v174 = vsel %vm172, %v101, 0
    %176 = vmatprep.subr.bf16.mxu0 %v157
    %177 = vmatpush1.bf16.msra.mxu0 %v156
    %178 = vmatprep.subr.bf16.mxu0 %v161
    %179 = vmatpush1.bf16.msra.mxu0 %v160
    %180 = vmatprep.subr.bf16.mxu0 0
    %181 = vmatpush1.bf16.msra.mxu0 0
    %182 = vmatprep.subr.bf16.mxu0 0
    %183 = vmatpush1.bf16.msra.mxu0 0
    %184 = vmatprep.subr.bf16.mxu0 0
    %185 = vmatpush1.bf16.msra.mxu0 0
    %186 = vmatprep.subr.bf16.mxu0 0
    %187 = vmatpush1.bf16.msra.mxu0 0
    %188 = vmatprep.subr.bf16.mxu0 0
    %189 = vmatpush1.bf16.msra.mxu0 0
    %190 = vmatprep.subr.bf16.mxu0 0
    %191 = vmatpush1.bf16.msra.mxu0 0
    %192 = vmatprep.subr.bf16.mxu0 0
    %193 = vmatpush1.bf16.msra.mxu0 0
    %194 = vmatprep.subr.bf16.mxu0 0
    %195 = vmatpush1.bf16.msra.mxu0 0
    %196 = vmatprep.subr.bf16.mxu0 0
    %197 = vmatpush1.bf16.msra.mxu0 0
    %198 = vmatprep.subr.bf16.mxu0 0
    %199 = vmatpush1.bf16.msra.mxu0 0
    %200 = vmatprep.subr.bf16.mxu0 0
    %201 = vmatpush1.bf16.msra.mxu0 0
    %202 = vmatprep.subr.bf16.mxu0 0
    %203 = vmatpush1.bf16.msra.mxu0 0
    %204 = vmatprep.subr.bf16.mxu0 0
    %205 = vmatpush1.bf16.msra.mxu0 0
    %206 = vmatprep.subr.bf16.mxu0 0
    %207 = vmatpush1.bf16.msra.mxu0 0
    %208 = vmatprep.mubr.bf16.mxu0 0
    %209 = vmatmul.mubr.bf16.gmra.mrb[0].mxu0 %v174
    %v210 = vpop.f32.mrb[0].mxu0
    %v211 = vadd.f32 %v115, %v210
    %v212 = vpop.f32.mrb[0].mxu0
    %v213 = vadd.f32 %v119, %v212
    %v214 = vpop.f32.mrb[0].mxu0
    %v215 = vpop.f32.mrb[0].mxu0
    %216 = vdwg.mxu0
    %217 = vmatprep.subr.bf16.mxu0 %v159
    %218 = vmatpush1.bf16.msra.mxu0 %v158
    %219 = vmatprep.subr.bf16.mxu0 %v163
    %220 = vmatpush1.bf16.msra.mxu0 %v162
    %221 = vmatprep.subr.bf16.mxu0 0
    %222 = vmatpush1.bf16.msra.mxu0 0
    %223 = vmatprep.subr.bf16.mxu0 0
    %224 = vmatpush1.bf16.msra.mxu0 0
    %225 = vmatprep.subr.bf16.mxu0 0
    %226 = vmatpush1.bf16.msra.mxu0 0
    %227 = vmatprep.subr.bf16.mxu0 0
    %228 = vmatpush1.bf16.msra.mxu0 0
    %229 = vmatprep.subr.bf16.mxu0 0
    %230 = vmatpush1.bf16.msra.mxu0 0
    %231 = vmatprep.subr.bf16.mxu0 0
    %232 = vmatpush1.bf16.msra.mxu0 0
    %233 = vmatprep.subr.bf16.mxu0 0
    %234 = vmatpush1.bf16.msra.mxu0 0
    %235 = vmatprep.subr.bf16.mxu0 0
    %236 = vmatpush1.bf16.msra.mxu0 0
    %237 = vmatprep.subr.bf16.mxu0 0
    %238 = vmatpush1.bf16.msra.mxu0 0
    %239 = vmatprep.subr.bf16.mxu0 0
    %240 = vmatpush1.bf16.msra.mxu0 0
    %241 = vmatprep.subr.bf16.mxu0 0
    %242 = vmatpush1.bf16.msra.mxu0 0
    %243 = vmatprep.subr.bf16.mxu0 0
    %244 = vmatpush1.bf16.msra.mxu0 0
    %245 = vmatprep.subr.bf16.mxu0 0
    %246 = vmatpush1.bf16.msra.mxu0 0
    %247 = vmatprep.subr.bf16.mxu0 0
    %248 = vmatpush1.bf16.msra.mxu0 0
    %249 = vmatprep.mubr.bf16.mxu0 0
    %250 = vmatmul.mubr.bf16.gmra.mrb[0].mxu0 %v174
    %v251 = vpop.f32.mrb[0].mxu0
    %v252 = vadd.f32 %v123, %v251
    %v253 = vpop.f32.mrb[0].mxu0
    %v254 = vadd.f32 %v127, %v253
    %v255 = vpop.f32.mrb[0].mxu0
    %v256 = vpop.f32.mrb[0].mxu0
    %257 = vdwg.mxu0
    %v258 = vmax.f32 %v211, 0.0
    %v259 = vmax.f32 %v213, 0.0
    %v260 = vmax.f32 %v252, 0.0
    %v261 = vmax.f32 %v254, 0.0
    %v262 = vmin.f32 %v258, 6.0
    %v263 = vmin.f32 %v259, 6.0
    %v264 = vmin.f32 %v260, 6.0
    %v265 = vmin.f32 %v261, 6.0
    %v266 = vpack.c.bf16 %v262, %v262
    %v267 = vpack.c.bf16 %v263, %v263
    %v268 = vpack.c.bf16 %v264, %v264
    %v269 = vpack.c.bf16 %v265, %v265
    %v270 = vld [vmem:[#allocation7] sm:$0xff]
    %v271 = vld [vmem:[#allocation7 + $0x8] sm:$0xff]
    %v272 = vld [vmem:[#allocation7 + $0x10] sm:$0xff]
    %v273 = vld [vmem:[#allocation7 + $0x18] sm:$0xff]
    %v274 = vld [vmem:[#allocation7 + $0x20] sm:$0xff]
    %v275 = vld [vmem:[#allocation7 + $0x28] sm:$0xff]
    %v276 = vld [vmem:[#allocation7 + $0x30] sm:$0xff]
    %v277 = vld [vmem:[#allocation7 + $0x38] sm:$0xff]
    %v278 = vld [vmem:[#allocation7 + $0x40] sm:$0xff]
    %v279 = vld [vmem:[#allocation7 + $0x48] sm:$0xff]
    %v280 = vld [vmem:[#allocation7 + $0x50] sm:$0xff]
    %v281 = vld [vmem:[#allocation7 + $0x58] sm:$0xff]
    %v282 = vld [vmem:[#allocation7 + $0x60] sm:$0xff]
    %v283 = vld [vmem:[#allocation7 + $0x68] sm:$0xff]
    %v284 = vld [vmem:[#allocation7 + $0x70] sm:$0xff]
    %v285 = vld [vmem:[#allocation7 + $0x78] sm:$0xff]
    %v286 = vld [vmem:[#allocation7 + $0x80] sm:$0xff]
    %v287 = vld [vmem:[#allocation7 + $0x88] sm:$0xff]
    %v288 = vld [vmem:[#allocation7 + $0x90] sm:$0xff]
    %v289 = vld [vmem:[#allocation7 + $0x98] sm:$0xff]
    %v290 = vld [vmem:[#allocation7 + $0xa0] sm:$0xff]
    %v291 = vld [vmem:[#allocation7 + $0xa8] sm:$0xff]
    %v292 = vld [vmem:[#allocation7 + $0xb0] sm:$0xff]
    %v293 = vld [vmem:[#allocation7 + $0xb8] sm:$0xff]
    %v294 = vld [vmem:[#allocation7 + $0xc0] sm:$0xff]
    %v295 = vld [vmem:[#allocation7 + $0xc8] sm:$0xff]
    %v296 = vld [vmem:[#allocation7 + $0xd0] sm:$0xff]
    %v297 = vld [vmem:[#allocation7 + $0xd8] sm:$0xff]
    %v298 = vld [vmem:[#allocation7 + $0xe0] sm:$0xff]
    %v299 = vld [vmem:[#allocation7 + $0xe8] sm:$0xff]
    %v300 = vld [vmem:[#allocation7 + $0xf0] sm:$0xff]
    %v301 = vld [vmem:[#allocation7 + $0xf8] sm:$0xff]
    %v302 = vld [vmem:[#allocation7 + $0x100] sm:$0xff]
    %v303 = vld [vmem:[#allocation7 + $0x108] sm:$0xff]
    %v304 = vld [vmem:[#allocation7 + $0x110] sm:$0xff]
    %v305 = vld [vmem:[#allocation7 + $0x118] sm:$0xff]
    %v306 = vld [vmem:[#allocation7 + $0x120] sm:$0xff]
    %v307 = vld [vmem:[#allocation7 + $0x128] sm:$0xff]
    %v308 = vld [vmem:[#allocation7 + $0x130] sm:$0xff]
    %v309 = vld [vmem:[#allocation7 + $0x138] sm:$0xff]
    %v310 = vld [vmem:[#allocation7 + $0x140] sm:$0xff]
    %v311 = vld [vmem:[#allocation7 + $0x148] sm:$0xff]
    %v312 = vld [vmem:[#allocation7 + $0x150] sm:$0xff]
    %v313 = vld [vmem:[#allocation7 + $0x158] sm:$0xff]
    %v314 = vld [vmem:[#allocation7 + $0x160] sm:$0xff]
    %v315 = vld [vmem:[#allocation7 + $0x168] sm:$0xff]
    %v316 = vld [vmem:[#allocation7 + $0x170] sm:$0xff]
    %v317 = vld [vmem:[#allocation7 + $0x178] sm:$0xff]
    %v318 = vld [vmem:[#allocation7 + $0x180] sm:$0xff]
    %v319 = vld [vmem:[#allocation7 + $0x188] sm:$0xff]
    %v320 = vld [vmem:[#allocation7 + $0x190] sm:$0xff]
    %v321 = vld [vmem:[#allocation7 + $0x198] sm:$0xff]
    %v322 = vld [vmem:[#allocation7 + $0x1a0] sm:$0xff]
    %v323 = vld [vmem:[#allocation7 + $0x1a8] sm:$0xff]
    %v324 = vld [vmem:[#allocation7 + $0x1b0] sm:$0xff]
    %v325 = vld [vmem:[#allocation7 + $0x1b8] sm:$0xff]
    %v326 = vld [vmem:[#allocation7 + $0x1c0] sm:$0xff]
    %v327 = vld [vmem:[#allocation7 + $0x1c8] sm:$0xff]
    %v328 = vld [vmem:[#allocation7 + $0x1d0] sm:$0xff]
    %v329 = vld [vmem:[#allocation7 + $0x1d8] sm:$0xff]
    %v330 = vld [vmem:[#allocation7 + $0x1e0] sm:$0xff]
    %v331 = vld [vmem:[#allocation7 + $0x1e8] sm:$0xff]
    %v332 = vld [vmem:[#allocation7 + $0x1f0] sm:$0xff]
    %v333 = vld [vmem:[#allocation7 + $0x1f8] sm:$0xff]
    %v334 = vld [vmem:[%s4] sm:$0x3]
    %v336 = vlaneseq
    %v337 = vshrl.u32 %v336, 7
    %v338 = vsub.s32 0, %v337
    %v339 = vrot.slane %v334, %v338
    %v340 = vlaneseq
    %v341 = vshrl.u32 %v340, 7
    %v342 = vsub.s32 1, %v341
    %v343 = vrot.slane %v334, %v342
    %v410 = vunpack.c.l.b16 %v270
    %v411 = vunpack.c.h.b16 %v270
    %v412 = vunpack.c.l.b16 %v271
    %v413 = vunpack.c.h.b16 %v271
    %v414 = vunpack.c.l.b16 %v272
    %v415 = vunpack.c.h.b16 %v272
    %v416 = vunpack.c.l.b16 %v273
    %v417 = vunpack.c.h.b16 %v273
    %v418 = vunpack.c.l.b16 %v274
    %v419 = vunpack.c.h.b16 %v274
    %v420 = vunpack.c.l.b16 %v275
    %v421 = vunpack.c.h.b16 %v275
    %v422 = vunpack.c.l.b16 %v276
    %v423 = vunpack.c.h.b16 %v276
    %v424 = vunpack.c.l.b16 %v277
    %v425 = vunpack.c.h.b16 %v277
    %v426 = vunpack.c.l.b16 %v278
    %v427 = vunpack.c.h.b16 %v278
    %v428 = vunpack.c.l.b16 %v279
    %v429 = vunpack.c.h.b16 %v279
    %v430 = vunpack.c.l.b16 %v280
    %v431 = vunpack.c.h.b16 %v280
    %v432 = vunpack.c.l.b16 %v281
    %v433 = vunpack.c.h.b16 %v281
    %v434 = vunpack.c.l.b16 %v282
    %v435 = vunpack.c.h.b16 %v282
    %v436 = vunpack.c.l.b16 %v283
    %v437 = vunpack.c.h.b16 %v283
    %v438 = vunpack.c.l.b16 %v284
    %v439 = vunpack.c.h.b16 %v284
    %v440 = vunpack.c.l.b16 %v285
    %v441 = vunpack.c.h.b16 %v285
    %v442 = vunpack.c.l.b16 %v286
    %v443 = vunpack.c.h.b16 %v286
    %v444 = vunpack.c.l.b16 %v287
    %v445 = vunpack.c.h.b16 %v287
    %v446 = vunpack.c.l.b16 %v288
    %v447 = vunpack.c.h.b16 %v288
    %v448 = vunpack.c.l.b16 %v289
    %v449 = vunpack.c.h.b16 %v289
    %v450 = vunpack.c.l.b16 %v290
    %v451 = vunpack.c.h.b16 %v290
    %v452 = vunpack.c.l.b16 %v291
    %v453 = vunpack.c.h.b16 %v291
    %v454 = vunpack.c.l.b16 %v292
    %v455 = vunpack.c.h.b16 %v292
    %v456 = vunpack.c.l.b16 %v293
    %v457 = vunpack.c.h.b16 %v293
    %v458 = vunpack.c.l.b16 %v294
    %v459 = vunpack.c.h.b16 %v294
    %v460 = vunpack.c.l.b16 %v295
    %v461 = vunpack.c.h.b16 %v295
    %v462 = vunpack.c.l.b16 %v296
    %v463 = vunpack.c.h.b16 %v296
    %v464 = vunpack.c.l.b16 %v297
    %v465 = vunpack.c.h.b16 %v297
    %v466 = vunpack.c.l.b16 %v298
    %v467 = vunpack.c.h.b16 %v298
    %v468 = vunpack.c.l.b16 %v299
    %v469 = vunpack.c.h.b16 %v299
    %v470 = vunpack.c.l.b16 %v300
    %v471 = vunpack.c.h.b16 %v300
    %v472 = vunpack.c.l.b16 %v301
    %v473 = vunpack.c.h.b16 %v301
    %v474 = vunpack.c.l.b16 %v302
    %v475 = vunpack.c.h.b16 %v302
    %v476 = vunpack.c.l.b16 %v303
    %v477 = vunpack.c.h.b16 %v303
    %v478 = vunpack.c.l.b16 %v304
    %v479 = vunpack.c.h.b16 %v304
    %v480 = vunpack.c.l.b16 %v305
    %v481 = vunpack.c.h.b16 %v305
    %v482 = vunpack.c.l.b16 %v306
    %v483 = vunpack.c.h.b16 %v306
    %v484 = vunpack.c.l.b16 %v307
    %v485 = vunpack.c.h.b16 %v307
    %v486 = vunpack.c.l.b16 %v308
    %v487 = vunpack.c.h.b16 %v308
    %v488 = vunpack.c.l.b16 %v309
    %v489 = vunpack.c.h.b16 %v309
    %v490 = vunpack.c.l.b16 %v310
    %v491 = vunpack.c.h.b16 %v310
    %v492 = vunpack.c.l.b16 %v311
    %v493 = vunpack.c.h.b16 %v311
    %v494 = vunpack.c.l.b16 %v312
    %v495 = vunpack.c.h.b16 %v312
    %v496 = vunpack.c.l.b16 %v313
    %v497 = vunpack.c.h.b16 %v313
    %v498 = vunpack.c.l.b16 %v314
    %v499 = vunpack.c.h.b16 %v314
    %v500 = vunpack.c.l.b16 %v315
    %v501 = vunpack.c.h.b16 %v315
    %v502 = vunpack.c.l.b16 %v316
    %v503 = vunpack.c.h.b16 %v316
    %v504 = vunpack.c.l.b16 %v317
    %v505 = vunpack.c.h.b16 %v317
    %v506 = vunpack.c.l.b16 %v318
    %v507 = vunpack.c.h.b16 %v318
    %v508 = vunpack.c.l.b16 %v319
    %v509 = vunpack.c.h.b16 %v319
    %v510 = vunpack.c.l.b16 %v320
    %v511 = vunpack.c.h.b16 %v320
    %v512 = vunpack.c.l.b16 %v321
    %v513 = vunpack.c.h.b16 %v321
    %v514 = vunpack.c.l.b16 %v322
    %v515 = vunpack.c.h.b16 %v322
    %v516 = vunpack.c.l.b16 %v323
    %v517 = vunpack.c.h.b16 %v323
    %v518 = vunpack.c.l.b16 %v324
    %v519 = vunpack.c.h.b16 %v324
    %v520 = vunpack.c.l.b16 %v325
    %v521 = vunpack.c.h.b16 %v325
    %v522 = vunpack.c.l.b16 %v326
    %v523 = vunpack.c.h.b16 %v326
    %v524 = vunpack.c.l.b16 %v327
    %v525 = vunpack.c.h.b16 %v327
    %v526 = vunpack.c.l.b16 %v328
    %v527 = vunpack.c.h.b16 %v328
    %v528 = vunpack.c.l.b16 %v329
    %v529 = vunpack.c.h.b16 %v329
    %v530 = vunpack.c.l.b16 %v330
    %v531 = vunpack.c.h.b16 %v330
    %v532 = vunpack.c.l.b16 %v331
    %v533 = vunpack.c.h.b16 %v331
    %v534 = vunpack.c.l.b16 %v332
    %v535 = vunpack.c.h.b16 %v332
    %v536 = vunpack.c.l.b16 %v333
    %v537 = vunpack.c.h.b16 %v333
    %v538 = vpack.c.b16 %v412, %v410
    %v539 = vpack.c.b16 %v413, %v411
    %v540 = vpack.c.b16 %v416, %v414
    %v541 = vpack.c.b16 %v417, %v415
    %v542 = vpack.c.b16 %v420, %v418
    %v543 = vpack.c.b16 %v421, %v419
    %v544 = vpack.c.b16 %v424, %v422
    %v545 = vpack.c.b16 %v425, %v423
    %v546 = vpack.c.b16 %v428, %v426
    %v547 = vpack.c.b16 %v429, %v427
    %v548 = vpack.c.b16 %v432, %v430
    %v549 = vpack.c.b16 %v433, %v431
    %v550 = vpack.c.b16 %v436, %v434
    %v551 = vpack.c.b16 %v437, %v435
    %v552 = vpack.c.b16 %v440, %v438
    %v553 = vpack.c.b16 %v441, %v439
    %v554 = vpack.c.b16 %v444, %v442
    %v555 = vpack.c.b16 %v445, %v443
    %v556 = vpack.c.b16 %v448, %v446
    %v557 = vpack.c.b16 %v449, %v447
    %v558 = vpack.c.b16 %v452, %v450
    %v559 = vpack.c.b16 %v453, %v451
    %v560 = vpack.c.b16 %v456, %v454
    %v561 = vpack.c.b16 %v457, %v455
    %v562 = vpack.c.b16 %v460, %v458
    %v563 = vpack.c.b16 %v461, %v459
    %v564 = vpack.c.b16 %v464, %v462
    %v565 = vpack.c.b16 %v465, %v463
    %v566 = vpack.c.b16 %v468, %v466
    %v567 = vpack.c.b16 %v469, %v467
    %v568 = vpack.c.b16 %v472, %v470
    %v569 = vpack.c.b16 %v473, %v471
    %v570 = vpack.c.b16 %v476, %v474
    %v571 = vpack.c.b16 %v477, %v475
    %v572 = vpack.c.b16 %v480, %v478
    %v573 = vpack.c.b16 %v481, %v479
    %v574 = vpack.c.b16 %v484, %v482
    %v575 = vpack.c.b16 %v485, %v483
    %v576 = vpack.c.b16 %v488, %v486
    %v577 = vpack.c.b16 %v489, %v487
    %v578 = vpack.c.b16 %v492, %v490
    %v579 = vpack.c.b16 %v493, %v491
    %v580 = vpack.c.b16 %v496, %v494
    %v581 = vpack.c.b16 %v497, %v495
    %v582 = vpack.c.b16 %v500, %v498
    %v583 = vpack.c.b16 %v501, %v499
    %v584 = vpack.c.b16 %v504, %v502
    %v585 = vpack.c.b16 %v505, %v503
    %v586 = vpack.c.b16 %v508, %v506
    %v587 = vpack.c.b16 %v509, %v507
    %v588 = vpack.c.b16 %v512, %v510
    %v589 = vpack.c.b16 %v513, %v511
    %v590 = vpack.c.b16 %v516, %v514
    %v591 = vpack.c.b16 %v517, %v515
    %v592 = vpack.c.b16 %v520, %v518
    %v593 = vpack.c.b16 %v521, %v519
    %v594 = vpack.c.b16 %v524, %v522
    %v595 = vpack.c.b16 %v525, %v523
    %v596 = vpack.c.b16 %v528, %v526
    %v597 = vpack.c.b16 %v529, %v527
    %v598 = vpack.c.b16 %v532, %v530
    %v599 = vpack.c.b16 %v533, %v531
    %v600 = vpack.c.b16 %v536, %v534
    %v601 = vpack.c.b16 %v537, %v535
    %666 = vmatprep.subr.bf16.mxu0 %v539
    %667 = vmatpush1.bf16.msra.mxu0 %v538
    %668 = vmatprep.subr.bf16.mxu0 %v541
    %669 = vmatpush1.bf16.msra.mxu0 %v540
    %670 = vmatprep.subr.bf16.mxu0 %v543
    %671 = vmatpush1.bf16.msra.mxu0 %v542
    %672 = vmatprep.subr.bf16.mxu0 %v545
    %673 = vmatpush1.bf16.msra.mxu0 %v544
    %674 = vmatprep.subr.bf16.mxu0 %v547
    %675 = vmatpush1.bf16.msra.mxu0 %v546
    %676 = vmatprep.subr.bf16.mxu0 %v549
    %677 = vmatpush1.bf16.msra.mxu0 %v548
    %678 = vmatprep.subr.bf16.mxu0 %v551
    %679 = vmatpush1.bf16.msra.mxu0 %v550
    %680 = vmatprep.subr.bf16.mxu0 %v553
    %681 = vmatpush1.bf16.msra.mxu0 %v552
    %682 = vmatprep.subr.bf16.mxu0 %v555
    %683 = vmatpush1.bf16.msra.mxu0 %v554
    %684 = vmatprep.subr.bf16.mxu0 %v557
    %685 = vmatpush1.bf16.msra.mxu0 %v556
    %686 = vmatprep.subr.bf16.mxu0 %v559
    %687 = vmatpush1.bf16.msra.mxu0 %v558
    %688 = vmatprep.subr.bf16.mxu0 %v561
    %689 = vmatpush1.bf16.msra.mxu0 %v560
    %690 = vmatprep.subr.bf16.mxu0 %v563
    %691 = vmatpush1.bf16.msra.mxu0 %v562
    %692 = vmatprep.subr.bf16.mxu0 %v565
    %693 = vmatpush1.bf16.msra.mxu0 %v564
    %694 = vmatprep.subr.bf16.mxu0 %v567
    %695 = vmatpush1.bf16.msra.mxu0 %v566
    %696 = vmatprep.subr.bf16.mxu0 %v569
    %697 = vmatpush1.bf16.msra.mxu0 %v568
    %698 = vmatprep.mubr.bf16.mxu0 %v267
    %699 = vmatmul.mubr.bf16.gmra.mrb[0].mxu0 %v266
    %v700 = vpop.f32.mrb[0].mxu0
    %v701 = vadd.f32 %v339, %v700
    %v702 = vpop.f32.mrb[0].mxu0
    %v703 = vadd.f32 %v343, %v702
    %v704 = vpop.f32.mrb[0].mxu0
    %v705 = vpop.f32.mrb[0].mxu0
    %706 = vdwg.mxu0
    %707 = vmatprep.subr.bf16.mxu0 %v571
    %708 = vmatpush1.bf16.msra.mxu0 %v570
    %709 = vmatprep.subr.bf16.mxu0 %v573
    %710 = vmatpush1.bf16.msra.mxu0 %v572
    %711 = vmatprep.subr.bf16.mxu0 %v575
    %712 = vmatpush1.bf16.msra.mxu0 %v574
    %713 = vmatprep.subr.bf16.mxu0 %v577
    %714 = vmatpush1.bf16.msra.mxu0 %v576
    %715 = vmatprep.subr.bf16.mxu0 %v579
    %716 = vmatpush1.bf16.msra.mxu0 %v578
    %717 = vmatprep.subr.bf16.mxu0 %v581
    %718 = vmatpush1.bf16.msra.mxu0 %v580
    %719 = vmatprep.subr.bf16.mxu0 %v583
    %720 = vmatpush1.bf16.msra.mxu0 %v582
    %721 = vmatprep.subr.bf16.mxu0 %v585
    %722 = vmatpush1.bf16.msra.mxu0 %v584
    %723 = vmatprep.subr.bf16.mxu0 %v587
    %724 = vmatpush1.bf16.msra.mxu0 %v586
    %725 = vmatprep.subr.bf16.mxu0 %v589
    %726 = vmatpush1.bf16.msra.mxu0 %v588
    %727 = vmatprep.subr.bf16.mxu0 %v591
    %728 = vmatpush1.bf16.msra.mxu0 %v590
    %729 = vmatprep.subr.bf16.mxu0 %v593
    %730 = vmatpush1.bf16.msra.mxu0 %v592
    %731 = vmatprep.subr.bf16.mxu0 %v595
    %732 = vmatpush1.bf16.msra.mxu0 %v594
    %733 = vmatprep.subr.bf16.mxu0 %v597
    %734 = vmatpush1.bf16.msra.mxu0 %v596
    %735 = vmatprep.subr.bf16.mxu0 %v599
    %736 = vmatpush1.bf16.msra.mxu0 %v598
    %737 = vmatprep.subr.bf16.mxu0 %v601
    %738 = vmatpush1.bf16.msra.mxu0 %v600
    %739 = vmatprep.mubr.bf16.mxu0 %v269
    %740 = vmatmul.mubr.bf16.gmra.mrb[0].mxu0 %v268
    %v741 = vpop.f32.mrb[0].mxu0
    %v742 = vadd.f32 %v701, %v741
    %v743 = vpop.f32.mrb[0].mxu0
    %v744 = vadd.f32 %v703, %v743
    %v745 = vpop.f32.mrb[0].mxu0
    %v746 = vpop.f32.mrb[0].mxu0
    %747 = vdwg.mxu0
    %v748 = vmax.f32 %v742, 0.0
    %v749 = vmax.f32 %v744, 0.0
    %v750 = vmin.f32 %v748, 6.0
    %v751 = vmin.f32 %v749, 6.0
    %v752 = vpack.c.bf16 %v750, %v750
    %v753 = vpack.c.bf16 %v751, %v751
    %v754 = vld [vmem:[#allocation8] sm:$0xff]
    %v755 = vld [vmem:[#allocation8 + $0x8] sm:$0xff]
    %v756 = vld [vmem:[#allocation8 + $0x10] sm:$0xff]
    %v757 = vld [vmem:[#allocation8 + $0x18] sm:$0xff]
    %v758 = vld [vmem:[#allocation8 + $0x20] sm:$0xff]
    %v759 = vld [vmem:[#allocation8 + $0x28] sm:$0xff]
    %v760 = vld [vmem:[#allocation8 + $0x30] sm:$0xff]
    %v761 = vld [vmem:[#allocation8 + $0x38] sm:$0xff]
    %v762 = vld [vmem:[#allocation8 + $0x40] sm:$0xff]
    %v763 = vld [vmem:[#allocation8 + $0x48] sm:$0xff]
    %v764 = vld [vmem:[#allocation8 + $0x50] sm:$0xff]
    %v765 = vld [vmem:[#allocation8 + $0x58] sm:$0xff]
    %v766 = vld [vmem:[#allocation8 + $0x60] sm:$0xff]
    %v767 = vld [vmem:[#allocation8 + $0x68] sm:$0xff]
    %v768 = vld [vmem:[#allocation8 + $0x70] sm:$0xff]
    %v769 = vld [vmem:[#allocation8 + $0x78] sm:$0xff]
    %v770 = vld [vmem:[#allocation8 + $0x80] sm:$0xff]
    %v771 = vld [vmem:[#allocation8 + $0x88] sm:$0xff]
    %v772 = vld [vmem:[#allocation8 + $0x90] sm:$0xff]
    %v773 = vld [vmem:[#allocation8 + $0x98] sm:$0xff]
    %v774 = vld [vmem:[#allocation8 + $0xa0] sm:$0xff]
    %v775 = vld [vmem:[#allocation8 + $0xa8] sm:$0xff]
    %v776 = vld [vmem:[#allocation8 + $0xb0] sm:$0xff]
    %v777 = vld [vmem:[#allocation8 + $0xb8] sm:$0xff]
    %v778 = vld [vmem:[#allocation8 + $0xc0] sm:$0xff]
    %v779 = vld [vmem:[#allocation8 + $0xc8] sm:$0xff]
    %v780 = vld [vmem:[#allocation8 + $0xd0] sm:$0xff]
    %v781 = vld [vmem:[#allocation8 + $0xd8] sm:$0xff]
    %v782 = vld [vmem:[#allocation8 + $0xe0] sm:$0xff]
    %v783 = vld [vmem:[#allocation8 + $0xe8] sm:$0xff]
    %v784 = vld [vmem:[#allocation8 + $0xf0] sm:$0xff]
    %v785 = vld [vmem:[#allocation8 + $0xf8] sm:$0xff]
    %v786 = vld [vmem:[%s6] sm:$0x3]
    %v788 = vlaneseq
    %v789 = vshrl.u32 %v788, 7
    %v790 = vsub.s32 0, %v789
    %v791 = vrot.slane %v786, %v790
    %v792 = vlaneseq
    %v793 = vshrl.u32 %v792, 7
    %v794 = vsub.s32 1, %v793
    %v795 = vrot.slane %v786, %v794
    %v830 = vunpack.c.l.b16 %v754
    %v831 = vunpack.c.h.b16 %v754
    %v832 = vunpack.c.l.b16 %v755
    %v833 = vunpack.c.h.b16 %v755
    %v834 = vunpack.c.l.b16 %v756
    %v835 = vunpack.c.h.b16 %v756
    %v836 = vunpack.c.l.b16 %v757
    %v837 = vunpack.c.h.b16 %v757
    %v838 = vunpack.c.l.b16 %v758
    %v839 = vunpack.c.h.b16 %v758
    %v840 = vunpack.c.l.b16 %v759
    %v841 = vunpack.c.h.b16 %v759
    %v842 = vunpack.c.l.b16 %v760
    %v843 = vunpack.c.h.b16 %v760
    %v844 = vunpack.c.l.b16 %v761
    %v845 = vunpack.c.h.b16 %v761
    %v846 = vunpack.c.l.b16 %v762
    %v847 = vunpack.c.h.b16 %v762
    %v848 = vunpack.c.l.b16 %v763
    %v849 = vunpack.c.h.b16 %v763
    %v850 = vunpack.c.l.b16 %v764
    %v851 = vunpack.c.h.b16 %v764
    %v852 = vunpack.c.l.b16 %v765
    %v853 = vunpack.c.h.b16 %v765
    %v854 = vunpack.c.l.b16 %v766
    %v855 = vunpack.c.h.b16 %v766
    %v856 = vunpack.c.l.b16 %v767
    %v857 = vunpack.c.h.b16 %v767
    %v858 = vunpack.c.l.b16 %v768
    %v859 = vunpack.c.h.b16 %v768
    %v860 = vunpack.c.l.b16 %v769
    %v861 = vunpack.c.h.b16 %v769
    %v862 = vunpack.c.l.b16 %v770
    %v863 = vunpack.c.h.b16 %v770
    %v864 = vunpack.c.l.b16 %v771
    %v865 = vunpack.c.h.b16 %v771
    %v866 = vunpack.c.l.b16 %v772
    %v867 = vunpack.c.h.b16 %v772
    %v868 = vunpack.c.l.b16 %v773
    %v869 = vunpack.c.h.b16 %v773
    %v870 = vunpack.c.l.b16 %v774
    %v871 = vunpack.c.h.b16 %v774
    %v872 = vunpack.c.l.b16 %v775
    %v873 = vunpack.c.h.b16 %v775
    %v874 = vunpack.c.l.b16 %v776
    %v875 = vunpack.c.h.b16 %v776
    %v876 = vunpack.c.l.b16 %v777
    %v877 = vunpack.c.h.b16 %v777
    %v878 = vunpack.c.l.b16 %v778
    %v879 = vunpack.c.h.b16 %v778
    %v880 = vunpack.c.l.b16 %v779
    %v881 = vunpack.c.h.b16 %v779
    %v882 = vunpack.c.l.b16 %v780
    %v883 = vunpack.c.h.b16 %v780
    %v884 = vunpack.c.l.b16 %v781
    %v885 = vunpack.c.h.b16 %v781
    %v886 = vunpack.c.l.b16 %v782
    %v887 = vunpack.c.h.b16 %v782
    %v888 = vunpack.c.l.b16 %v783
    %v889 = vunpack.c.h.b16 %v783
    %v890 = vunpack.c.l.b16 %v784
    %v891 = vunpack.c.h.b16 %v784
    %v892 = vunpack.c.l.b16 %v785
    %v893 = vunpack.c.h.b16 %v785
    %v894 = vpack.c.b16 %v832, %v830
    %v895 = vpack.c.b16 %v833, %v831
    %v896 = vpack.c.b16 %v836, %v834
    %v897 = vpack.c.b16 %v837, %v835
    %v898 = vpack.c.b16 %v840, %v838
    %v899 = vpack.c.b16 %v841, %v839
    %v900 = vpack.c.b16 %v844, %v842
    %v901 = vpack.c.b16 %v845, %v843
    %v902 = vpack.c.b16 %v848, %v846
    %v903 = vpack.c.b16 %v849, %v847
    %v904 = vpack.c.b16 %v852, %v850
    %v905 = vpack.c.b16 %v853, %v851
    %v906 = vpack.c.b16 %v856, %v854
    %v907 = vpack.c.b16 %v857, %v855
    %v908 = vpack.c.b16 %v860, %v858
    %v909 = vpack.c.b16 %v861, %v859
    %v910 = vpack.c.b16 %v864, %v862
    %v911 = vpack.c.b16 %v865, %v863
    %v912 = vpack.c.b16 %v868, %v866
    %v913 = vpack.c.b16 %v869, %v867
    %v914 = vpack.c.b16 %v872, %v870
    %v915 = vpack.c.b16 %v873, %v871
    %v916 = vpack.c.b16 %v876, %v874
    %v917 = vpack.c.b16 %v877, %v875
    %v918 = vpack.c.b16 %v880, %v878
    %v919 = vpack.c.b16 %v881, %v879
    %v920 = vpack.c.b16 %v884, %v882
    %v921 = vpack.c.b16 %v885, %v883
    %v922 = vpack.c.b16 %v888, %v886
    %v923 = vpack.c.b16 %v889, %v887
    %v924 = vpack.c.b16 %v892, %v890
    %v925 = vpack.c.b16 %v893, %v891
    %958 = vmatprep.subr.bf16.mxu0 %v895
    %959 = vmatpush1.bf16.msra.mxu0 %v894
    %960 = vmatprep.subr.bf16.mxu0 %v897
    %961 = vmatpush1.bf16.msra.mxu0 %v896
    %962 = vmatprep.subr.bf16.mxu0 %v899
    %963 = vmatpush1.bf16.msra.mxu0 %v898
    %964 = vmatprep.subr.bf16.mxu0 %v901
    %965 = vmatpush1.bf16.msra.mxu0 %v900
    %966 = vmatprep.subr.bf16.mxu0 %v903
    %967 = vmatpush1.bf16.msra.mxu0 %v902
    %968 = vmatprep.subr.bf16.mxu0 %v905
    %969 = vmatpush1.bf16.msra.mxu0 %v904
    %970 = vmatprep.subr.bf16.mxu0 %v907
    %971 = vmatpush1.bf16.msra.mxu0 %v906
    %972 = vmatprep.subr.bf16.mxu0 %v909
    %973 = vmatpush1.bf16.msra.mxu0 %v908
    %974 = vmatprep.subr.bf16.mxu0 %v911
    %975 = vmatpush1.bf16.msra.mxu0 %v910
    %976 = vmatprep.subr.bf16.mxu0 %v913
    %977 = vmatpush1.bf16.msra.mxu0 %v912
    %978 = vmatprep.subr.bf16.mxu0 %v915
    %979 = vmatpush1.bf16.msra.mxu0 %v914
    %980 = vmatprep.subr.bf16.mxu0 %v917
    %981 = vmatpush1.bf16.msra.mxu0 %v916
    %982 = vmatprep.subr.bf16.mxu0 %v919
    %983 = vmatpush1.bf16.msra.mxu0 %v918
    %984 = vmatprep.subr.bf16.mxu0 %v921
    %985 = vmatpush1.bf16.msra.mxu0 %v920
    %986 = vmatprep.subr.bf16.mxu0 %v923
    %987 = vmatpush1.bf16.msra.mxu0 %v922
    %988 = vmatprep.subr.bf16.mxu0 %v925
    %989 = vmatpush1.bf16.msra.mxu0 %v924
    %990 = vmatprep.mubr.bf16.mxu0 %v753
    %991 = vmatmul.mubr.bf16.gmra.mrb[0].mxu0 %v752
    %v992 = vpop.f32.mrb[0].mxu0
    %v993 = vadd.f32 %v791, %v992
    %v994 = vpop.f32.mrb[0].mxu0
    %v995 = vadd.f32 %v795, %v994
    %v996 = vpop.f32.mrb[0].mxu0
    %v997 = vpop.f32.mrb[0].mxu0
    %998 = vdwg.mxu0
    %v999 = vmax.f32 %v993, 0.0
    %v1000 = vmax.f32 %v995, 0.0
    %v1001 = vmin.f32 %v999, 6.0
    %v1002 = vmin.f32 %v1000, 6.0
    %v1003 = vpack.c.bf16 %v1001, %v1001
    %v1004 = vpack.c.bf16 %v1002, %v1002
    %v1005 = vld [vmem:[#allocation10] sm:$0xf]
    %v1006 = vld [vmem:[#allocation10 + $0x4] sm:$0xf]
    %v1007 = vld [vmem:[#allocation10 + $0x8] sm:$0xf]
    %v1008 = vld [vmem:[#allocation10 + $0xc] sm:$0xf]
    %v1009 = vld [vmem:[#allocation10 + $0x10] sm:$0xf]
    %v1010 = vld [vmem:[#allocation10 + $0x14] sm:$0xf]
    %v1011 = vld [vmem:[#allocation10 + $0x18] sm:$0xf]
    %v1012 = vld [vmem:[#allocation10 + $0x1c] sm:$0xf]
    %v1013 = vld [vmem:[#allocation10 + $0x20] sm:$0xf]
    %v1014 = vld [vmem:[#allocation10 + $0x24] sm:$0xf]
    %v1015 = vld [vmem:[#allocation10 + $0x28] sm:$0xf]
    %v1016 = vld [vmem:[#allocation10 + $0x2c] sm:$0xf]
    %v1017 = vld [vmem:[#allocation10 + $0x30] sm:$0xf]
    %v1018 = vld [vmem:[#allocation10 + $0x34] sm:$0xf]
    %v1019 = vld [vmem:[#allocation10 + $0x38] sm:$0xf]
    %v1020 = vld [vmem:[#allocation10 + $0x3c] sm:$0xf]
    %v1021 = vld [vmem:[#allocation10 + $0x40] sm:$0xf]
    %v1022 = vld [vmem:[#allocation10 + $0x44] sm:$0xf]
    %v1023 = vld [vmem:[#allocation10 + $0x48] sm:$0xf]
    %v1024 = vld [vmem:[#allocation10 + $0x4c] sm:$0xf]
    %v1025 = vld [vmem:[#allocation10 + $0x50] sm:$0xf]
    %v1026 = vld [vmem:[#allocation10 + $0x54] sm:$0xf]
    %v1027 = vld [vmem:[#allocation10 + $0x58] sm:$0xf]
    %v1028 = vld [vmem:[#allocation10 + $0x5c] sm:$0xf]
    %v1029 = vld [vmem:[#allocation10 + $0x60] sm:$0xf]
    %v1030 = vld [vmem:[#allocation10 + $0x64] sm:$0xf]
    %v1031 = vld [vmem:[#allocation10 + $0x68] sm:$0xf]
    %v1032 = vld [vmem:[#allocation10 + $0x6c] sm:$0xf]
    %v1033 = vld [vmem:[#allocation10 + $0x70] sm:$0xf]
    %v1034 = vld [vmem:[#allocation10 + $0x74] sm:$0xf]
    %v1035 = vld [vmem:[#allocation10 + $0x78] sm:$0xf]
    %v1036 = vld [vmem:[#allocation10 + $0x7c] sm:$0xf]
    %v1037 = vld [vmem:[%s8] sm:$0x1]
    %v1039 = vlaneseq
    %v1040 = vshrl.u32 %v1039, 7
    %v1041 = vsub.s32 0, %v1040
    %v1042 = vrot.slane %v1037, %v1041
    %v1076 = vunpack.c.l.b16 %v1005
    %v1077 = vunpack.c.l.b16 %v1006
    %v1078 = vunpack.c.l.b16 %v1007
    %v1079 = vunpack.c.l.b16 %v1008
    %v1080 = vunpack.c.l.b16 %v1009
    %v1081 = vunpack.c.l.b16 %v1010
    %v1082 = vunpack.c.l.b16 %v1011
    %v1083 = vunpack.c.l.b16 %v1012
    %v1084 = vunpack.c.l.b16 %v1013
    %v1085 = vunpack.c.l.b16 %v1014
    %v1086 = vunpack.c.l.b16 %v1015
    %v1087 = vunpack.c.l.b16 %v1016
    %v1088 = vunpack.c.l.b16 %v1017
    %v1089 = vunpack.c.l.b16 %v1018
    %v1090 = vunpack.c.l.b16 %v1019
    %v1091 = vunpack.c.l.b16 %v1020
    %v1092 = vunpack.c.l.b16 %v1021
    %v1093 = vunpack.c.l.b16 %v1022
    %v1094 = vunpack.c.l.b16 %v1023
    %v1095 = vunpack.c.l.b16 %v1024
    %v1096 = vunpack.c.l.b16 %v1025
    %v1097 = vunpack.c.l.b16 %v1026
    %v1098 = vunpack.c.l.b16 %v1027
    %v1099 = vunpack.c.l.b16 %v1028
    %v1100 = vunpack.c.l.b16 %v1029
    %v1101 = vunpack.c.l.b16 %v1030
    %v1102 = vunpack.c.l.b16 %v1031
    %v1103 = vunpack.c.l.b16 %v1032
    %v1104 = vunpack.c.l.b16 %v1033
    %v1105 = vunpack.c.l.b16 %v1034
    %v1106 = vunpack.c.l.b16 %v1035
    %v1107 = vunpack.c.l.b16 %v1036
    %v1108 = vpack.c.b16 %v1077, %v1076
    %v1109 = vpack.c.b16 %v1079, %v1078
    %v1110 = vpack.c.b16 %v1081, %v1080
    %v1111 = vpack.c.b16 %v1083, %v1082
    %v1112 = vpack.c.b16 %v1085, %v1084
    %v1113 = vpack.c.b16 %v1087, %v1086
    %v1114 = vpack.c.b16 %v1089, %v1088
    %v1115 = vpack.c.b16 %v1091, %v1090
    %v1116 = vpack.c.b16 %v1093, %v1092
    %v1117 = vpack.c.b16 %v1095, %v1094
    %v1118 = vpack.c.b16 %v1097, %v1096
    %v1119 = vpack.c.b16 %v1099, %v1098
    %v1120 = vpack.c.b16 %v1101, %v1100
    %v1121 = vpack.c.b16 %v1103, %v1102
    %v1122 = vpack.c.b16 %v1105, %v1104
    %v1123 = vpack.c.b16 %v1107, %v1106
    %1140 = vmatprep.subr.bf16.mxu0 0
    %1141 = vmatpush1.bf16.msra.mxu0 %v1108
    %1142 = vmatprep.subr.bf16.mxu0 0
    %1143 = vmatpush1.bf16.msra.mxu0 %v1109
    %1144 = vmatprep.subr.bf16.mxu0 0
    %1145 = vmatpush1.bf16.msra.mxu0 %v1110
    %1146 = vmatprep.subr.bf16.mxu0 0
    %1147 = vmatpush1.bf16.msra.mxu0 %v1111
    %1148 = vmatprep.subr.bf16.mxu0 0
    %1149 = vmatpush1.bf16.msra.mxu0 %v1112
    %1150 = vmatprep.subr.bf16.mxu0 0
    %1151 = vmatpush1.bf16.msra.mxu0 %v1113
    %1152 = vmatprep.subr.bf16.mxu0 0
    %1153 = vmatpush1.bf16.msra.mxu0 %v1114
    %1154 = vmatprep.subr.bf16.mxu0 0
    %1155 = vmatpush1.bf16.msra.mxu0 %v1115
    %1156 = vmatprep.subr.bf16.mxu0 0
    %1157 = vmatpush1.bf16.msra.mxu0 %v1116
    %1158 = vmatprep.subr.bf16.mxu0 0
    %1159 = vmatpush1.bf16.msra.mxu0 %v1117
    %1160 = vmatprep.subr.bf16.mxu0 0
    %1161 = vmatpush1.bf16.msra.mxu0 %v1118
    %1162 = vmatprep.subr.bf16.mxu0 0
    %1163 = vmatpush1.bf16.msra.mxu0 %v1119
    %1164 = vmatprep.subr.bf16.mxu0 0
    %1165 = vmatpush1.bf16.msra.mxu0 %v1120
    %1166 = vmatprep.subr.bf16.mxu0 0
    %1167 = vmatpush1.bf16.msra.mxu0 %v1121
    %1168 = vmatprep.subr.bf16.mxu0 0
    %1169 = vmatpush1.bf16.msra.mxu0 %v1122
    %1170 = vmatprep.subr.bf16.mxu0 0
    %1171 = vmatpush1.bf16.msra.mxu0 %v1123
    %1172 = vmatprep.mubr.bf16.mxu0 %v1004
    %1173 = vmatmul.mubr.bf16.gmra.mrb[0].mxu0 %v1003
    %v1174 = vpop.f32.mrb[0].mxu0
    %v1175 = vadd.f32 %v1042, %v1174
    %v1176 = vpop.f32.mrb[0].mxu0
    %v1177 = vpop.f32.mrb[0].mxu0
    %v1178 = vpop.f32.mrb[0].mxu0
    %1179 = vdwg.mxu0
    %1180 = vst [vmem:[#allocation11] sm:$0xff] %v1175
    // Predicated region
    $region58: #{tpu_custom_call.1} parent=1 // pred_check
      _
    $region59: #{tpu_custom_call.1} parent=1 // pred_check_branch
      %1182 = sbr.rel (0) target = $region61
    $region60: #{tpu_custom_call.1} parent=1 // pred_region
      %s1184 = ssub.s32 128, 128
      %1185 = vsyncadd [#allocation4], %s1184
      %s1187 = sshll.u32 [#allocation11], 4
      %s1188 = int_to_ptr.vmem [resolvable:$true] %s1187
      %1190 = dma.vmem_to_hbm [thread:$0]  %s1188, 128, %s9, [#allocation4]
    $region61: #{tpu_custom_call.1} parent=1 // pred_fallthru
      _
    // Predicated region
    $region62: #{tpu_custom_call.1} parent=1 // pred_check
      _
    $region63: #{tpu_custom_call.1} parent=1 // pred_check_branch
      %1192 = sbr.rel (0) target = $region65
    $region64: #{tpu_custom_call.1} parent=1 // pred_region
      %1193 = dma.done [#allocation4], 128
    $region65: #{tpu_custom_call.1} parent=1 // pred_fallthru
      _
    %1194 = vsyncpa [#allocation3], 1
    %1195 = vsyncpa [#allocation6], 1
    %1196 = vsyncpa [#allocation9], 1
    %1197 = vsyncpa [#allocation4], 1

</llo_original>
